<compile_context>
chip_gen: v7x
topology: tpu7x:2x2x1
jax: 0.10.0
libtpu: 0.0.40
codegen_flags: <defaults>
</compile_context>

<pallas_src>
import functools

import jax
import jax.numpy as jnp
from jax import lax
from jax.experimental import pallas as pl
from jax.experimental.pallas import tpu as pltpu

NUM_UNITS = 40             # params['model__module__num_units'] = [40]
IN_FEATURES = 3            # (cos theta, sin theta, omega)
AUG_FEATURES = IN_FEATURES + 1   # layer-1 bias folded in as a constant-1 row
OUT_FEATURES = 1
LANE_CHUNK = 512           # lanes per inner step (multiple of 128)
DEFAULT_BATCH_TILE = 8192  # rows per grid step (amortises per-step overhead)
_HIGHEST = jax.lax.Precision.HIGHEST


def _mlp_kernel(xa_ref, w1a_ref, w2_ref, b2_ref, o_ref):
    """Fused Linear(3->H) -> ReLU -> Linear(H->1) -> clip, batch on lanes.

    xa_ref : (4, TB) f32   inputs transposed (batch on lanes), row 3 == 1.0
    w1a_ref: (H, 4)  f32   layer-1 weights with b1 folded in as column 3
    w2_ref : (1, H)  f32   layer-2 weights as a row
    b2_ref : (1, 1)  f32
    o_ref  : (1, TB) f32   outputs, lane-dense
    """
    # Loop-invariant weights: loaded once per grid step, live in vregs.
    w1a = w1a_ref[...]
    w2 = w2_ref[...]
    b2 = b2_ref[...]

    def compute_chunk(off, size):
        xa = xa_ref[:, pl.ds(off, size)]                           # (4, size)
        # Layer 1 (+bias) on the MXU; f32 multi-pass keeps 1e-5 parity.
        h = jnp.dot(w1a, xa, preferred_element_type=jnp.float32,
                    precision=_HIGHEST)                            # (H, size)
        h = jnp.maximum(h, 0.0)                                    # ReLU (VPU)
        # Layer 2 on the MXU as (1,H)x(H,size); bias add + clip on the VPU.
        y = jnp.dot(w2, h, preferred_element_type=jnp.float32,
                    precision=_HIGHEST) + b2                       # (1, size)
        o_ref[:, pl.ds(off, size)] = jnp.clip(y, -2.0, 2.0).astype(o_ref.dtype)

    tb = o_ref.shape[-1]
    n_full = tb // LANE_CHUNK
    rem = tb % LANE_CHUNK

    if n_full > 0:
        def body(c, carry):
            off = pl.multiple_of(c * LANE_CHUNK, LANE_CHUNK)
            compute_chunk(off, LANE_CHUNK)
            return carry
        lax.fori_loop(0, n_full, body, 0, unroll=min(8, n_full))
    if rem > 0:
        # Static tail chunk (rem is a multiple of 128 by construction).
        compute_chunk(n_full * LANE_CHUNK, rem)


def _round_up(v, m):
    return -(-v // m) * m


@functools.partial(jax.jit, static_argnames=("batch_tile",))
def nn_forward(x, w1, b1, w2, b2, *, batch_tile=DEFAULT_BATCH_TILE):
    """y = clip(relu(x @ w1 + b1) @ w2 + b2, -2, 2)  (same math as the torch NN).

    x : (B, 3) any float dtype (cast to f32 like the torch module).
    w1: (3, H), b1: (H,), w2: (H, 1), b2: (1,).
    Returns (B, 1) float32.  Any B is accepted (padded internally).
    """
    assert batch_tile % 128 == 0
    x = jnp.asarray(x, jnp.float32)            # mirrors x.to(torch.float32)
    B = x.shape[0]
    H = w1.shape[1]

    # Split the batch evenly across grid tiles (each a multiple of 128 lanes):
    #  * small B  -> one tile of round_up(B, 128) (no 2048x padding waste)
    #  * B > tile -> >= 2 tiles, so the "parallel" grid axis feeds both v7x TCs.
    n_tiles = max(1, -(-B // batch_tile))
    tile = max(128, _round_up(-(-B // n_tiles), 128))
    Bp = n_tiles * tile

    # Batch on the lane axis; fold the layer-1 bias in via a constant-1 row.
    xa = jnp.concatenate([x.T, jnp.ones((1, B), jnp.float32)], axis=0)  # (4, B)
    if Bp != B:
        xa = jnp.pad(xa, ((0, 0), (0, Bp - B)))   # padded lanes are discarded

    w1a = jnp.concatenate(
        [jnp.asarray(w1, jnp.float32).T,                      # (H, 3)
         jnp.asarray(b1, jnp.float32).reshape(H, 1)], axis=1)  # -> (H, 4)
    w2r = jnp.asarray(w2, jnp.float32).reshape(H, OUT_FEATURES).T  # (1, H)
    b2c = jnp.asarray(b2, jnp.float32).reshape(OUT_FEATURES, OUT_FEATURES)

    yT = pl.pallas_call(
        _mlp_kernel,
        out_shape=jax.ShapeDtypeStruct((OUT_FEATURES, Bp), jnp.float32),
        grid_spec=pltpu.PrefetchScalarGridSpec(
            num_scalar_prefetch=0,
            grid=(n_tiles,),
            in_specs=[
                # batch-tiled, lane-dense augmented activations
                pl.BlockSpec((AUG_FEATURES, tile), lambda i: (0, i)),
                # tiny weights / biases: full-array blocks, resident in VMEM
                pl.BlockSpec((H, AUG_FEATURES), lambda i: (0, 0)),
                pl.BlockSpec((OUT_FEATURES, H), lambda i: (0, 0)),
                pl.BlockSpec((OUT_FEATURES, OUT_FEATURES), lambda i: (0, 0)),
            ],
            out_specs=pl.BlockSpec((OUT_FEATURES, tile), lambda i: (0, i)),
        ),
        compiler_params=pltpu.CompilerParams(
            dimension_semantics=("parallel",),   # lets v7x split tiles across its 2 TCs
        ),
    )(xa, w1a, w2r, b2c)

    return yT[:, :B].T   # (B, 1), same shape as the torch module output


def init_params(key, num_units=NUM_UNITS):
    """Deterministic init mimicking PyTorch's default Linear init:
    U(-1/sqrt(fan_in), 1/sqrt(fan_in)) for weights and biases."""
    k1, k2, k3, k4 = jax.random.split(key, 4)
    bound1 = 1.0 / jnp.sqrt(jnp.float32(IN_FEATURES))
    bound2 = 1.0 / jnp.sqrt(jnp.float32(num_units))
    w1 = jax.random.uniform(k1, (IN_FEATURES, num_units), jnp.float32, -bound1, bound1)
    b1 = jax.random.uniform(k2, (num_units,), jnp.float32, -bound1, bound1)
    w2 = jax.random.uniform(k3, (num_units, OUT_FEATURES), jnp.float32, -bound2, bound2)
    b2 = jax.random.uniform(k4, (OUT_FEATURES,), jnp.float32, -bound2, bound2)
    return w1, b1, w2, b2


if __name__ == "__main__":
    key = jax.random.PRNGKey(0)
    k_x, k_p = jax.random.split(key)

    batch = 64   # small demo batch; ragged / large sizes handled identically
    # inputs look like (cos theta, sin theta, omega)
    x = jax.random.uniform(k_x, (batch, IN_FEATURES), jnp.float32, -1.0, 1.0)

    w1, b1, w2, b2 = init_params(k_p, NUM_UNITS)

    y = nn_forward(x, w1, b1, w2, b2)
    y = jax.block_until_ready(y)

    # Exact-f32 reference (elementwise layer 1, f32 sum for layer 2).
    h_ref = jnp.maximum(
        x[:, 0:1] * w1[0] + x[:, 1:2] * w1[1] + x[:, 2:3] * w1[2] + b1, 0.0)
    y_ref = jnp.clip(
        jnp.sum(h_ref * w2[:, 0], axis=1, keepdims=True) + b2, -2.0, 2.0)

    assert y.shape == (batch, OUT_FEATURES)
    assert jnp.allclose(y, y_ref, atol=1e-5, rtol=1e-5), float(
        jnp.max(jnp.abs(y - y_ref)))

    print("KERNEL_OK")
</pallas_src>

<mosaic_0001>
module attributes {stable_mosaic.version = 11 : i64} {
  func.func @_mlp_kernel(%arg0: i32, %arg1: memref<4x128xf32, #tpu.memory_space<vmem>>, %arg2: memref<40x4xf32, #tpu.memory_space<vmem>>, %arg3: memref<1x40xf32, #tpu.memory_space<vmem>>, %arg4: memref<1x1xf32, #tpu.memory_space<vmem>>, %arg5: memref<1x128xf32, #tpu.memory_space<vmem>>) attributes {dimension_semantics = [#tpu.dimension_semantics<parallel>], iteration_bounds = array<i64: 1>, scalar_prefetch = 0 : i64, scratch_operands = 0 : i64, tpu.core_type = #tpu.core_type<tc>, window_params = [{transform_indices = @transform_0, window_bounds = array<i64: 4, 128>}, {pipeline_mode = #tpu.pipeline_mode<synchronous>, transform_indices = @transform_1, window_bounds = array<i64: 40, 4>}, {pipeline_mode = #tpu.pipeline_mode<synchronous>, transform_indices = @transform_2, window_bounds = array<i64: 1, 40>}, {pipeline_mode = #tpu.pipeline_mode<synchronous>, transform_indices = @transform_3, window_bounds = array<i64: 1, 1>}, {transform_indices = @transform_4, window_bounds = array<i64: 1, 128>}]} {
    %c0 = arith.constant 0 : index
    %c0_0 = arith.constant 0 : index
    %0 = vector.load %arg2[%c0, %c0_0] : memref<40x4xf32, #tpu.memory_space<vmem>>, vector<40x4xf32>
    %c0_1 = arith.constant 0 : index
    %c0_2 = arith.constant 0 : index
    %1 = vector.load %arg3[%c0_1, %c0_2] : memref<1x40xf32, #tpu.memory_space<vmem>>, vector<1x40xf32>
    %c0_3 = arith.constant 0 : index
    %c0_4 = arith.constant 0 : index
    %2 = vector.load %arg4[%c0_3, %c0_4] : memref<1x1xf32, #tpu.memory_space<vmem>>, vector<1x1xf32>
    %c0_5 = arith.constant 0 : index
    %c0_6 = arith.constant 0 : index
    %3 = vector.load %arg1[%c0_5, %c0_6] : memref<4x128xf32, #tpu.memory_space<vmem>>, vector<4x128xf32>
    %cst = arith.constant dense<0.000000e+00> : vector<40x128xf32>
    %4 = tpu.matmul %0, %3, %cst {dimension_numbers = #tpu.dot_dimension_numbers<[1], [0], [0], [1], [0, 0, 1, 1], [], []>, precision = #tpu.contract_precision<fp32>} : vector<40x4xf32>, vector<4x128xf32>, vector<40x128xf32> -> vector<40x128xf32>
    %cst_7 = arith.constant 0.000000e+00 : f32
    %5 = vector.broadcast %cst_7 : f32 to vector<40x128xf32>
    %6 = arith.maximumf %4, %5 : vector<40x128xf32>
    %cst_8 = arith.constant dense<0.000000e+00> : vector<1x128xf32>
    %7 = tpu.matmul %1, %6, %cst_8 {dimension_numbers = #tpu.dot_dimension_numbers<[1], [0], [0], [1], [0, 0, 1, 1], [], []>, precision = #tpu.contract_precision<fp32>} : vector<1x40xf32>, vector<40x128xf32>, vector<1x128xf32> -> vector<1x128xf32>
    %8 = vector.broadcast %2 : vector<1x1xf32> to vector<1x128xf32>
    %9 = arith.addf %7, %8 : vector<1x128xf32>
    %cst_9 = arith.constant -2.000000e+00 : f32
    %cst_10 = arith.constant 2.000000e+00 : f32
    %10 = vector.broadcast %cst_9 : f32 to vector<1x128xf32>
    %11 = arith.maximumf %10, %9 : vector<1x128xf32>
    %12 = vector.broadcast %cst_10 : f32 to vector<1x128xf32>
    %13 = arith.minimumf %12, %11 : vector<1x128xf32>
    %c0_11 = arith.constant 0 : index
    %c0_12 = arith.constant 0 : index
    %14 = vector.load %arg5[%c0_11, %c0_12] : memref<1x128xf32, #tpu.memory_space<vmem>>, vector<1x128xf32>
    tpu.vector_store %arg5[%c0_11, %c0_12], %13 {strides = array<i32>} : memref<1x128xf32, #tpu.memory_space<vmem>>, vector<1x128xf32>,
    return
  }
  func.func @transform_0(%arg0: i32) -> (i32, i32) {
    %c0_i32 = arith.constant 0 : i32
    %c0_i32_0 = arith.constant 0 : i32
    return %c0_i32, %arg0 : i32, i32
  }
  func.func @transform_1(%arg0: i32) -> (i32, i32) {
    %c0_i32 = arith.constant 0 : i32
    %c0_i32_0 = arith.constant 0 : i32
    %c0_i32_1 = arith.constant 0 : i32
    return %c0_i32, %c0_i32_0 : i32, i32
  }
  func.func @transform_2(%arg0: i32) -> (i32, i32) {
    %c0_i32 = arith.constant 0 : i32
    %c0_i32_0 = arith.constant 0 : i32
    %c0_i32_1 = arith.constant 0 : i32
    return %c0_i32, %c0_i32_0 : i32, i32
  }
  func.func @transform_3(%arg0: i32) -> (i32, i32) {
    %c0_i32 = arith.constant 0 : i32
    %c0_i32_0 = arith.constant 0 : i32
    %c0_i32_1 = arith.constant 0 : i32
    return %c0_i32, %c0_i32_0 : i32, i32
  }
  func.func @transform_4(%arg0: i32) -> (i32, i32) {
    %c0_i32 = arith.constant 0 : i32
    %c0_i32_0 = arith.constant 0 : i32
    return %c0_i32, %arg0 : i32, i32
  }
}

</mosaic_0001>

<llo_original>
// kernel: nn_forward.1
$region0: #{nn_forward.1}
  #allocation0 [shape = 'u32[]', space=smem, size = 0x4, offset = 0x4, fixed_abs, tag = 'smem constant byte address 0x4 - core index']
  #allocation1 [shape = 'u32[144,128]{1,0:T(1,128)}', space=vmem, size = 0x12000, scoped, tag = 'internal scratch']
  #allocation2 [shape = 'f32[1,1]{1,0:T(1,128)S(1)}', space=vmem, size = 0x200, scoped, tag = 'scoped memory for nn_forward.1']
  %s0 = inlined_call_operand.vmem [shape: f32[4,128], index: 0, kind: input, shape index: {}]
  %s1 = inlined_call_operand.vmem [shape: f32[40,4], index: 1, kind: input, shape index: {}]
  %s2 = inlined_call_operand.vmem [shape: f32[1,40], index: 2, kind: input, shape index: {}]
  %s3 = inlined_call_operand.<no memory space> [shape: f32[1,1], index: 3, kind: input, shape index: {}]
  %s4 = inlined_call_operand.vmem [shape: f32[1,128], index: 4, kind: output, shape index: {}]
  %s5 = sld [smem:[#allocation0]]
  $region26: #{nn_forward.1} parent=0
    _
  %s7 = ssub.s32 1, %s5
  %s8 = scalar_select 0, %s7, %s5
  %v9 = vstv %s3
  %10 = vst [vmem:[#allocation2] sm:$0x1] %v9
  // Predicated region
  $region2: #{nn_forward.1} parent=0 // pred_check
    _
  $region3: #{nn_forward.1} parent=0 // pred_check_branch
    %12 = sbr.rel (0) target = $region5
  $region4: #{nn_forward.1} parent=0 // pred_region
    _
  $region5: #{nn_forward.1} parent=0 // pred_fallthru
    _
  // Predicated region
  $region6: #{nn_forward.1} parent=0 // pred_check
    _
  $region7: #{nn_forward.1} parent=0 // pred_check_branch
    %14 = sbr.rel (0) target = $region9
  $region8: #{nn_forward.1} parent=0 // pred_region
    _
  $region9: #{nn_forward.1} parent=0 // pred_fallthru
    _
  // Predicated region
  $region10: #{nn_forward.1} parent=0 // pred_check
    _
  $region11: #{nn_forward.1} parent=0 // pred_check_branch
    %16 = sbr.rel (0) target = $region13
  $region12: #{nn_forward.1} parent=0 // pred_region
    _
  $region13: #{nn_forward.1} parent=0 // pred_fallthru
    _
  // Predicated region
  $region14: #{nn_forward.1} parent=0 // pred_check
    _
  $region15: #{nn_forward.1} parent=0 // pred_check_branch
    %18 = sbr.rel (0) target = $region17
  $region16: #{nn_forward.1} parent=0 // pred_region
    _
  $region17: #{nn_forward.1} parent=0 // pred_fallthru
    _
  %v19 = vld [vmem:[%s1] sm:$0xff]
  %v20 = vld [vmem:[%s1 + $0x8] sm:$0xff]
  %v21 = vld [vmem:[%s1 + $0x10] sm:$0xff]
  %v22 = vld [vmem:[%s1 + $0x18] sm:$0xff]
  %v23 = vld [vmem:[%s1 + $0x20] sm:$0xff]
  %v24 = vld [vmem:[%s2] sm:$0x1]
  %v25 = vld [vmem:[#allocation2] sm:$0x1]
  %v26 = vld [vmem:[%s0] sm:$0xf]
  %vm27 = vcmask 31744
  %v29 = vsel %vm27, %v19, 0
  %v32 = vsel %vm27, %v20, 0
  %v35 = vsel %vm27, %v21, 0
  %v38 = vsel %vm27, %v22, 0
  %v41 = vsel %vm27, %v23, 0
  %vm43 = vcmask 1043456
  %v45 = vsel %vm43, %v26, 0
  %47 = vmatprep.subr.mxu0 0.0
  %v48 = vand.u32 %v45, 4294901760
  %49 = vmatpush1.msra.mxu0 %v48
  %50 = vmatprep.subr.mxu0 0.0
  %51 = vmatpush1.msra.mxu0 0.0
  %52 = vmatprep.subr.mxu0 0.0
  %53 = vmatpush1.msra.mxu0 0.0
  %54 = vmatprep.subr.mxu0 0.0
  %55 = vmatpush1.msra.mxu0 0.0
  %56 = vmatprep.subr.mxu0 0.0
  %57 = vmatpush1.msra.mxu0 0.0
  %58 = vmatprep.subr.mxu0 0.0
  %59 = vmatpush1.msra.mxu0 0.0
  %60 = vmatprep.subr.mxu0 0.0
  %61 = vmatpush1.msra.mxu0 0.0
  %62 = vmatprep.subr.mxu0 0.0
  %63 = vmatpush1.msra.mxu0 0.0
  %64 = vmatprep.subr.mxu0 0.0
  %65 = vmatpush1.msra.mxu0 0.0
  %66 = vmatprep.subr.mxu0 0.0
  %67 = vmatpush1.msra.mxu0 0.0
  %68 = vmatprep.subr.mxu0 0.0
  %69 = vmatpush1.msra.mxu0 0.0
  %70 = vmatprep.subr.mxu0 0.0
  %71 = vmatpush1.msra.mxu0 0.0
  %72 = vmatprep.subr.mxu0 0.0
  %73 = vmatpush1.msra.mxu0 0.0
  %74 = vmatprep.subr.mxu0 0.0
  %75 = vmatpush1.msra.mxu0 0.0
  %76 = vmatprep.subr.mxu0 0.0
  %77 = vmatpush1.msra.mxu0 0.0
  %78 = vmatprep.subr.mxu0 0.0
  %79 = vmatpush1.msra.mxu0 0.0
  %80 = vmatprep.subr.mxu0 0.0
  %81 = vmatpush1.msra.mxu0 0.0
  %82 = vmatprep.subr.mxu0 0.0
  %83 = vmatpush1.msra.mxu0 0.0
  %84 = vmatprep.subr.mxu0 0.0
  %85 = vmatpush1.msra.mxu0 0.0
  %86 = vmatprep.subr.mxu0 0.0
  %87 = vmatpush1.msra.mxu0 0.0
  %88 = vmatprep.subr.mxu0 0.0
  %89 = vmatpush1.msra.mxu0 0.0
  %90 = vmatprep.subr.mxu0 0.0
  %91 = vmatpush1.msra.mxu0 0.0
  %92 = vmatprep.subr.mxu0 0.0
  %93 = vmatpush1.msra.mxu0 0.0
  %94 = vmatprep.subr.mxu0 0.0
  %95 = vmatpush1.msra.mxu0 0.0
  %96 = vmatprep.subr.mxu0 0.0
  %97 = vmatpush1.msra.mxu0 0.0
  %98 = vmatprep.subr.mxu0 0.0
  %99 = vmatpush1.msra.mxu0 0.0
  %100 = vmatprep.subr.mxu0 0.0
  %101 = vmatpush1.msra.mxu0 0.0
  %102 = vmatprep.subr.mxu0 0.0
  %103 = vmatpush1.msra.mxu0 0.0
  %104 = vmatprep.subr.mxu0 0.0
  %105 = vmatpush1.msra.mxu0 0.0
  %106 = vmatprep.subr.mxu0 0.0
  %107 = vmatpush1.msra.mxu0 0.0
  %108 = vmatprep.subr.mxu0 0.0
  %109 = vmatpush1.msra.mxu0 0.0
  %110 = vmatprep.subr.mxu0 0.0
  %111 = vmatpush1.msra.mxu0 0.0
  %112 = vmatprep.mubr.f32.mxu0 0.0
  %v113 = vand.u32 %v29, 4294901760
  %v114 = vsub.f32 %v29, %v113
  %v115 = vand.u32 %v114, 4294901760
  %v116 = vsub.f32 %v114, %v115
  %v117 = vand.u32 %v116, 4294901760
  %118 = vmatmul.mubr.f32.gmra.mrb[0].mxu0 %v117
  %v119 = vpop.f32.mrb[0].mxu0
  %v120 = vadd.f32 0.0, %v119
  %v121 = vpop.f32.mrb[0].mxu0
  %122 = vmatprep.mubr.f32.mxu0 0.0
  %v123 = vand.u32 %v32, 4294901760
  %v124 = vsub.f32 %v32, %v123
  %v125 = vand.u32 %v124, 4294901760
  %v126 = vsub.f32 %v124, %v125
  %v127 = vand.u32 %v126, 4294901760
  %128 = vmatmul.mubr.f32.gmra.mrb[0].mxu0 %v127
  %v129 = vpop.f32.mrb[0].mxu0
  %v130 = vadd.f32 0.0, %v129
  %v131 = vpop.f32.mrb[0].mxu0
  %132 = vmatprep.mubr.f32.mxu0 0.0
  %v133 = vand.u32 %v35, 4294901760
  %v134 = vsub.f32 %v35, %v133
  %v135 = vand.u32 %v134, 4294901760
  %v136 = vsub.f32 %v134, %v135
  %v137 = vand.u32 %v136, 4294901760
  %138 = vmatmul.mubr.f32.gmra.mrb[0].mxu0 %v137
  %v139 = vpop.f32.mrb[0].mxu0
  %v140 = vadd.f32 0.0, %v139
  %v141 = vpop.f32.mrb[0].mxu0
  %142 = vmatprep.mubr.f32.mxu0 0.0
  %v143 = vand.u32 %v38, 4294901760
  %v144 = vsub.f32 %v38, %v143
  %v145 = vand.u32 %v144, 4294901760
  %v146 = vsub.f32 %v144, %v145
  %v147 = vand.u32 %v146, 4294901760
  %148 = vmatmul.mubr.f32.gmra.mrb[0].mxu0 %v147
  %v149 = vpop.f32.mrb[0].mxu0
  %v150 = vadd.f32 0.0, %v149
  %v151 = vpop.f32.mrb[0].mxu0
  %152 = vmatprep.mubr.f32.mxu0 0.0
  %v153 = vand.u32 %v41, 4294901760
  %v154 = vsub.f32 %v41, %v153
  %v155 = vand.u32 %v154, 4294901760
  %v156 = vsub.f32 %v154, %v155
  %v157 = vand.u32 %v156, 4294901760
  %158 = vmatmul.mubr.f32.gmra.mrb[0].mxu0 %v157
  %v159 = vpop.f32.mrb[0].mxu0
  %v160 = vadd.f32 0.0, %v159
  %v161 = vpop.f32.mrb[0].mxu0
  %162 = vdwg.mxu0
  %163 = vmatprep.subr.mxu0 0.0
  %v164 = vand.u32 %v45, 4294901760
  %v165 = vsub.f32 %v45, %v164
  %v166 = vand.u32 %v165, 4294901760
  %v167 = vsub.f32 %v165, %v166
  %v168 = vand.u32 %v167, 4294901760
  %169 = vmatpush1.msra.mxu0 %v168
  %170 = vmatprep.subr.mxu0 0.0
  %171 = vmatpush1.msra.mxu0 0.0
  %172 = vmatprep.subr.mxu0 0.0
  %173 = vmatpush1.msra.mxu0 0.0
  %174 = vmatprep.subr.mxu0 0.0
  %175 = vmatpush1.msra.mxu0 0.0
  %176 = vmatprep.subr.mxu0 0.0
  %177 = vmatpush1.msra.mxu0 0.0
  %178 = vmatprep.subr.mxu0 0.0
  %179 = vmatpush1.msra.mxu0 0.0
  %180 = vmatprep.subr.mxu0 0.0
  %181 = vmatpush1.msra.mxu0 0.0
  %182 = vmatprep.subr.mxu0 0.0
  %183 = vmatpush1.msra.mxu0 0.0
  %184 = vmatprep.subr.mxu0 0.0
  %185 = vmatpush1.msra.mxu0 0.0
  %186 = vmatprep.subr.mxu0 0.0
  %187 = vmatpush1.msra.mxu0 0.0
  %188 = vmatprep.subr.mxu0 0.0
  %189 = vmatpush1.msra.mxu0 0.0
  %190 = vmatprep.subr.mxu0 0.0
  %191 = vmatpush1.msra.mxu0 0.0
  %192 = vmatprep.subr.mxu0 0.0
  %193 = vmatpush1.msra.mxu0 0.0
  %194 = vmatprep.subr.mxu0 0.0
  %195 = vmatpush1.msra.mxu0 0.0
  %196 = vmatprep.subr.mxu0 0.0
  %197 = vmatpush1.msra.mxu0 0.0
  %198 = vmatprep.subr.mxu0 0.0
  %199 = vmatpush1.msra.mxu0 0.0
  %200 = vmatprep.subr.mxu0 0.0
  %201 = vmatpush1.msra.mxu0 0.0
  %202 = vmatprep.subr.mxu0 0.0
  %203 = vmatpush1.msra.mxu0 0.0
  %204 = vmatprep.subr.mxu0 0.0
  %205 = vmatpush1.msra.mxu0 0.0
  %206 = vmatprep.subr.mxu0 0.0
  %207 = vmatpush1.msra.mxu0 0.0
  %208 = vmatprep.subr.mxu0 0.0
  %209 = vmatpush1.msra.mxu0 0.0
  %210 = vmatprep.subr.mxu0 0.0
  %211 = vmatpush1.msra.mxu0 0.0
  %212 = vmatprep.subr.mxu0 0.0
  %213 = vmatpush1.msra.mxu0 0.0
  %214 = vmatprep.subr.mxu0 0.0
  %215 = vmatpush1.msra.mxu0 0.0
  %216 = vmatprep.subr.mxu0 0.0
  %217 = vmatpush1.msra.mxu0 0.0
  %218 = vmatprep.subr.mxu0 0.0
  %219 = vmatpush1.msra.mxu0 0.0
  %220 = vmatprep.subr.mxu0 0.0
  %221 = vmatpush1.msra.mxu0 0.0
  %222 = vmatprep.subr.mxu0 0.0
  %223 = vmatpush1.msra.mxu0 0.0
  %224 = vmatprep.subr.mxu0 0.0
  %225 = vmatpush1.msra.mxu0 0.0
  %226 = vmatprep.subr.mxu0 0.0
  %227 = vmatpush1.msra.mxu0 0.0
  %228 = vmatprep.subr.mxu0 0.0
  %229 = vmatpush1.msra.mxu0 0.0
  %230 = vmatprep.subr.mxu0 0.0
  %231 = vmatpush1.msra.mxu0 0.0
  %232 = vmatprep.mubr.f32.mxu0 0.0
  %v233 = vand.u32 %v29, 4294901760
  %234 = vmatmul.mubr.f32.gmra.mrb[0].mxu0 %v233
  %v235 = vpop.f32.mrb[0].mxu0
  %v236 = vadd.f32 %v120, %v235
  %v237 = vpop.f32.mrb[0].mxu0
  %238 = vmatprep.mubr.f32.mxu0 0.0
  %v239 = vand.u32 %v32, 4294901760
  %240 = vmatmul.mubr.f32.gmra.mrb[0].mxu0 %v239
  %v241 = vpop.f32.mrb[0].mxu0
  %v242 = vadd.f32 %v130, %v241
  %v243 = vpop.f32.mrb[0].mxu0
  %244 = vmatprep.mubr.f32.mxu0 0.0
  %v245 = vand.u32 %v35, 4294901760
  %246 = vmatmul.mubr.f32.gmra.mrb[0].mxu0 %v245
  %v247 = vpop.f32.mrb[0].mxu0
  %v248 = vadd.f32 %v140, %v247
  %v249 = vpop.f32.mrb[0].mxu0
  %250 = vmatprep.mubr.f32.mxu0 0.0
  %v251 = vand.u32 %v38, 4294901760
  %252 = vmatmul.mubr.f32.gmra.mrb[0].mxu0 %v251
  %v253 = vpop.f32.mrb[0].mxu0
  %v254 = vadd.f32 %v150, %v253
  %v255 = vpop.f32.mrb[0].mxu0
  %256 = vmatprep.mubr.f32.mxu0 0.0
  %v257 = vand.u32 %v41, 4294901760
  %258 = vmatmul.mubr.f32.gmra.mrb[0].mxu0 %v257
  %v259 = vpop.f32.mrb[0].mxu0
  %v260 = vadd.f32 %v160, %v259
  %v261 = vpop.f32.mrb[0].mxu0
  %262 = vdwg.mxu0
  %263 = vmatprep.subr.mxu0 0.0
  %v264 = vand.u32 %v45, 4294901760
  %v265 = vsub.f32 %v45, %v264
  %266 = vmatpush1.msra.mxu0 %v265
  %267 = vmatprep.subr.mxu0 0.0
  %268 = vmatpush1.msra.mxu0 0.0
  %269 = vmatprep.subr.mxu0 0.0
  %270 = vmatpush1.msra.mxu0 0.0
  %271 = vmatprep.subr.mxu0 0.0
  %272 = vmatpush1.msra.mxu0 0.0
  %273 = vmatprep.subr.mxu0 0.0
  %274 = vmatpush1.msra.mxu0 0.0
  %275 = vmatprep.subr.mxu0 0.0
  %276 = vmatpush1.msra.mxu0 0.0
  %277 = vmatprep.subr.mxu0 0.0
  %278 = vmatpush1.msra.mxu0 0.0
  %279 = vmatprep.subr.mxu0 0.0
  %280 = vmatpush1.msra.mxu0 0.0
  %281 = vmatprep.subr.mxu0 0.0
  %282 = vmatpush1.msra.mxu0 0.0
  %283 = vmatprep.subr.mxu0 0.0
  %284 = vmatpush1.msra.mxu0 0.0
  %285 = vmatprep.subr.mxu0 0.0
  %286 = vmatpush1.msra.mxu0 0.0
  %287 = vmatprep.subr.mxu0 0.0
  %288 = vmatpush1.msra.mxu0 0.0
  %289 = vmatprep.subr.mxu0 0.0
  %290 = vmatpush1.msra.mxu0 0.0
  %291 = vmatprep.subr.mxu0 0.0
  %292 = vmatpush1.msra.mxu0 0.0
  %293 = vmatprep.subr.mxu0 0.0
  %294 = vmatpush1.msra.mxu0 0.0
  %295 = vmatprep.subr.mxu0 0.0
  %296 = vmatpush1.msra.mxu0 0.0
  %297 = vmatprep.subr.mxu0 0.0
  %298 = vmatpush1.msra.mxu0 0.0
  %299 = vmatprep.subr.mxu0 0.0
  %300 = vmatpush1.msra.mxu0 0.0
  %301 = vmatprep.subr.mxu0 0.0
  %302 = vmatpush1.msra.mxu0 0.0
  %303 = vmatprep.subr.mxu0 0.0
  %304 = vmatpush1.msra.mxu0 0.0
  %305 = vmatprep.subr.mxu0 0.0
  %306 = vmatpush1.msra.mxu0 0.0
  %307 = vmatprep.subr.mxu0 0.0
  %308 = vmatpush1.msra.mxu0 0.0
  %309 = vmatprep.subr.mxu0 0.0
  %310 = vmatpush1.msra.mxu0 0.0
  %311 = vmatprep.subr.mxu0 0.0
  %312 = vmatpush1.msra.mxu0 0.0
  %313 = vmatprep.subr.mxu0 0.0
  %314 = vmatpush1.msra.mxu0 0.0
  %315 = vmatprep.subr.mxu0 0.0
  %316 = vmatpush1.msra.mxu0 0.0
  %317 = vmatprep.subr.mxu0 0.0
  %318 = vmatpush1.msra.mxu0 0.0
  %319 = vmatprep.subr.mxu0 0.0
  %320 = vmatpush1.msra.mxu0 0.0
  %321 = vmatprep.subr.mxu0 0.0
  %322 = vmatpush1.msra.mxu0 0.0
  %323 = vmatprep.subr.mxu0 0.0
  %324 = vmatpush1.msra.mxu0 0.0
  %325 = vmatprep.subr.mxu0 0.0
  %326 = vmatpush1.msra.mxu0 0.0
  %327 = vmatprep.subr.mxu0 0.0
  %328 = vmatpush1.msra.mxu0 0.0
  %329 = vmatprep.mubr.f32.mxu0 0.0
  %v330 = vand.u32 %v29, 4294901760
  %v331 = vsub.f32 %v29, %v330
  %332 = vmatmul.mubr.f32.gmra.mrb[0].mxu0 %v331
  %v333 = vpop.f32.mrb[0].mxu0
  %v334 = vadd.f32 %v236, %v333
  %v335 = vpop.f32.mrb[0].mxu0
  %336 = vmatprep.mubr.f32.mxu0 0.0
  %v337 = vand.u32 %v32, 4294901760
  %v338 = vsub.f32 %v32, %v337
  %339 = vmatmul.mubr.f32.gmra.mrb[0].mxu0 %v338
  %v340 = vpop.f32.mrb[0].mxu0
  %v341 = vadd.f32 %v242, %v340
  %v342 = vpop.f32.mrb[0].mxu0
  %343 = vmatprep.mubr.f32.mxu0 0.0
  %v344 = vand.u32 %v35, 4294901760
  %v345 = vsub.f32 %v35, %v344
  %346 = vmatmul.mubr.f32.gmra.mrb[0].mxu0 %v345
  %v347 = vpop.f32.mrb[0].mxu0
  %v348 = vadd.f32 %v248, %v347
  %v349 = vpop.f32.mrb[0].mxu0
  %350 = vmatprep.mubr.f32.mxu0 0.0
  %v351 = vand.u32 %v38, 4294901760
  %v352 = vsub.f32 %v38, %v351
  %353 = vmatmul.mubr.f32.gmra.mrb[0].mxu0 %v352
  %v354 = vpop.f32.mrb[0].mxu0
  %v355 = vadd.f32 %v254, %v354
  %v356 = vpop.f32.mrb[0].mxu0
  %357 = vmatprep.mubr.f32.mxu0 0.0
  %v358 = vand.u32 %v41, 4294901760
  %v359 = vsub.f32 %v41, %v358
  %360 = vmatmul.mubr.f32.gmra.mrb[0].mxu0 %v359
  %v361 = vpop.f32.mrb[0].mxu0
  %v362 = vadd.f32 %v260, %v361
  %v363 = vpop.f32.mrb[0].mxu0
  %364 = vdwg.mxu0
  %365 = vmatprep.subr.mxu0 0.0
  %v366 = vand.u32 %v45, 4294901760
  %367 = vmatpush1.msra.mxu0 %v366
  %368 = vmatprep.subr.mxu0 0.0
  %369 = vmatpush1.msra.mxu0 0.0
  %370 = vmatprep.subr.mxu0 0.0
  %371 = vmatpush1.msra.mxu0 0.0
  %372 = vmatprep.subr.mxu0 0.0
  %373 = vmatpush1.msra.mxu0 0.0
  %374 = vmatprep.subr.mxu0 0.0
  %375 = vmatpush1.msra.mxu0 0.0
  %376 = vmatprep.subr.mxu0 0.0
  %377 = vmatpush1.msra.mxu0 0.0
  %378 = vmatprep.subr.mxu0 0.0
  %379 = vmatpush1.msra.mxu0 0.0
  %380 = vmatprep.subr.mxu0 0.0
  %381 = vmatpush1.msra.mxu0 0.0
  %382 = vmatprep.subr.mxu0 0.0
  %383 = vmatpush1.msra.mxu0 0.0
  %384 = vmatprep.subr.mxu0 0.0
  %385 = vmatpush1.msra.mxu0 0.0
  %386 = vmatprep.subr.mxu0 0.0
  %387 = vmatpush1.msra.mxu0 0.0
  %388 = vmatprep.subr.mxu0 0.0
  %389 = vmatpush1.msra.mxu0 0.0
  %390 = vmatprep.subr.mxu0 0.0
  %391 = vmatpush1.msra.mxu0 0.0
  %392 = vmatprep.subr.mxu0 0.0
  %393 = vmatpush1.msra.mxu0 0.0
  %394 = vmatprep.subr.mxu0 0.0
  %395 = vmatpush1.msra.mxu0 0.0
  %396 = vmatprep.subr.mxu0 0.0
  %397 = vmatpush1.msra.mxu0 0.0
  %398 = vmatprep.subr.mxu0 0.0
  %399 = vmatpush1.msra.mxu0 0.0
  %400 = vmatprep.subr.mxu0 0.0
  %401 = vmatpush1.msra.mxu0 0.0
  %402 = vmatprep.subr.mxu0 0.0
  %403 = vmatpush1.msra.mxu0 0.0
  %404 = vmatprep.subr.mxu0 0.0
  %405 = vmatpush1.msra.mxu0 0.0
  %406 = vmatprep.subr.mxu0 0.0
  %407 = vmatpush1.msra.mxu0 0.0
  %408 = vmatprep.subr.mxu0 0.0
  %409 = vmatpush1.msra.mxu0 0.0
  %410 = vmatprep.subr.mxu0 0.0
  %411 = vmatpush1.msra.mxu0 0.0
  %412 = vmatprep.subr.mxu0 0.0
  %413 = vmatpush1.msra.mxu0 0.0
  %414 = vmatprep.subr.mxu0 0.0
  %415 = vmatpush1.msra.mxu0 0.0
  %416 = vmatprep.subr.mxu0 0.0
  %417 = vmatpush1.msra.mxu0 0.0
  %418 = vmatprep.subr.mxu0 0.0
  %419 = vmatpush1.msra.mxu0 0.0
  %420 = vmatprep.subr.mxu0 0.0
  %421 = vmatpush1.msra.mxu0 0.0
  %422 = vmatprep.subr.mxu0 0.0
  %423 = vmatpush1.msra.mxu0 0.0
  %424 = vmatprep.subr.mxu0 0.0
  %425 = vmatpush1.msra.mxu0 0.0
  %426 = vmatprep.subr.mxu0 0.0
  %427 = vmatpush1.msra.mxu0 0.0
  %428 = vmatprep.subr.mxu0 0.0
  %429 = vmatpush1.msra.mxu0 0.0
  %430 = vmatprep.mubr.f32.mxu0 0.0
  %v431 = vand.u32 %v29, 4294901760
  %v432 = vsub.f32 %v29, %v431
  %v433 = vand.u32 %v432, 4294901760
  %434 = vmatmul.mubr.f32.gmra.mrb[0].mxu0 %v433
  %v435 = vpop.f32.mrb[0].mxu0
  %v436 = vadd.f32 %v334, %v435
  %v437 = vpop.f32.mrb[0].mxu0
  %438 = vmatprep.mubr.f32.mxu0 0.0
  %v439 = vand.u32 %v32, 4294901760
  %v440 = vsub.f32 %v32, %v439
  %v441 = vand.u32 %v440, 4294901760
  %442 = vmatmul.mubr.f32.gmra.mrb[0].mxu0 %v441
  %v443 = vpop.f32.mrb[0].mxu0
  %v444 = vadd.f32 %v341, %v443
  %v445 = vpop.f32.mrb[0].mxu0
  %446 = vmatprep.mubr.f32.mxu0 0.0
  %v447 = vand.u32 %v35, 4294901760
  %v448 = vsub.f32 %v35, %v447
  %v449 = vand.u32 %v448, 4294901760
  %450 = vmatmul.mubr.f32.gmra.mrb[0].mxu0 %v449
  %v451 = vpop.f32.mrb[0].mxu0
  %v452 = vadd.f32 %v348, %v451
  %v453 = vpop.f32.mrb[0].mxu0
  %454 = vmatprep.mubr.f32.mxu0 0.0
  %v455 = vand.u32 %v38, 4294901760
  %v456 = vsub.f32 %v38, %v455
  %v457 = vand.u32 %v456, 4294901760
  %458 = vmatmul.mubr.f32.gmra.mrb[0].mxu0 %v457
  %v459 = vpop.f32.mrb[0].mxu0
  %v460 = vadd.f32 %v355, %v459
  %v461 = vpop.f32.mrb[0].mxu0
  %462 = vmatprep.mubr.f32.mxu0 0.0
  %v463 = vand.u32 %v41, 4294901760
  %v464 = vsub.f32 %v41, %v463
  %v465 = vand.u32 %v464, 4294901760
  %466 = vmatmul.mubr.f32.gmra.mrb[0].mxu0 %v465
  %v467 = vpop.f32.mrb[0].mxu0
  %v468 = vadd.f32 %v362, %v467
  %v469 = vpop.f32.mrb[0].mxu0
  %470 = vdwg.mxu0
  %471 = vmatprep.subr.mxu0 0.0
  %v472 = vand.u32 %v45, 4294901760
  %v473 = vsub.f32 %v45, %v472
  %v474 = vand.u32 %v473, 4294901760
  %475 = vmatpush1.msra.mxu0 %v474
  %476 = vmatprep.subr.mxu0 0.0
  %477 = vmatpush1.msra.mxu0 0.0
  %478 = vmatprep.subr.mxu0 0.0
  %479 = vmatpush1.msra.mxu0 0.0
  %480 = vmatprep.subr.mxu0 0.0
  %481 = vmatpush1.msra.mxu0 0.0
  %482 = vmatprep.subr.mxu0 0.0
  %483 = vmatpush1.msra.mxu0 0.0
  %484 = vmatprep.subr.mxu0 0.0
  %485 = vmatpush1.msra.mxu0 0.0
  %486 = vmatprep.subr.mxu0 0.0
  %487 = vmatpush1.msra.mxu0 0.0
  %488 = vmatprep.subr.mxu0 0.0
  %489 = vmatpush1.msra.mxu0 0.0
  %490 = vmatprep.subr.mxu0 0.0
  %491 = vmatpush1.msra.mxu0 0.0
  %492 = vmatprep.subr.mxu0 0.0
  %493 = vmatpush1.msra.mxu0 0.0
  %494 = vmatprep.subr.mxu0 0.0
  %495 = vmatpush1.msra.mxu0 0.0
  %496 = vmatprep.subr.mxu0 0.0
  %497 = vmatpush1.msra.mxu0 0.0
  %498 = vmatprep.subr.mxu0 0.0
  %499 = vmatpush1.msra.mxu0 0.0
  %500 = vmatprep.subr.mxu0 0.0
  %501 = vmatpush1.msra.mxu0 0.0
  %502 = vmatprep.subr.mxu0 0.0
  %503 = vmatpush1.msra.mxu0 0.0
  %504 = vmatprep.subr.mxu0 0.0
  %505 = vmatpush1.msra.mxu0 0.0
  %506 = vmatprep.subr.mxu0 0.0
  %507 = vmatpush1.msra.mxu0 0.0
  %508 = vmatprep.subr.mxu0 0.0
  %509 = vmatpush1.msra.mxu0 0.0
  %510 = vmatprep.subr.mxu0 0.0
  %511 = vmatpush1.msra.mxu0 0.0
  %512 = vmatprep.subr.mxu0 0.0
  %513 = vmatpush1.msra.mxu0 0.0
  %514 = vmatprep.subr.mxu0 0.0
  %515 = vmatpush1.msra.mxu0 0.0
  %516 = vmatprep.subr.mxu0 0.0
  %517 = vmatpush1.msra.mxu0 0.0
  %518 = vmatprep.subr.mxu0 0.0
  %519 = vmatpush1.msra.mxu0 0.0
  %520 = vmatprep.subr.mxu0 0.0
  %521 = vmatpush1.msra.mxu0 0.0
  %522 = vmatprep.subr.mxu0 0.0
  %523 = vmatpush1.msra.mxu0 0.0
  %524 = vmatprep.subr.mxu0 0.0
  %525 = vmatpush1.msra.mxu0 0.0
  %526 = vmatprep.subr.mxu0 0.0
  %527 = vmatpush1.msra.mxu0 0.0
  %528 = vmatprep.subr.mxu0 0.0
  %529 = vmatpush1.msra.mxu0 0.0
  %530 = vmatprep.subr.mxu0 0.0
  %531 = vmatpush1.msra.mxu0 0.0
  %532 = vmatprep.subr.mxu0 0.0
  %533 = vmatpush1.msra.mxu0 0.0
  %534 = vmatprep.subr.mxu0 0.0
  %535 = vmatpush1.msra.mxu0 0.0
  %536 = vmatprep.subr.mxu0 0.0
  %537 = vmatpush1.msra.mxu0 0.0
  %538 = vmatprep.mubr.f32.mxu0 0.0
  %v539 = vand.u32 %v29, 4294901760
  %540 = vmatmul.mubr.f32.gmra.mrb[0].mxu0 %v539
  %v541 = vpop.f32.mrb[0].mxu0
  %v542 = vadd.f32 %v436, %v541
  %v543 = vpop.f32.mrb[0].mxu0
  %544 = vmatprep.mubr.f32.mxu0 0.0
  %v545 = vand.u32 %v32, 4294901760
  %546 = vmatmul.mubr.f32.gmra.mrb[0].mxu0 %v545
  %v547 = vpop.f32.mrb[0].mxu0
  %v548 = vadd.f32 %v444, %v547
  %v549 = vpop.f32.mrb[0].mxu0
  %550 = vmatprep.mubr.f32.mxu0 0.0
  %v551 = vand.u32 %v35, 4294901760
  %552 = vmatmul.mubr.f32.gmra.mrb[0].mxu0 %v551
  %v553 = vpop.f32.mrb[0].mxu0
  %v554 = vadd.f32 %v452, %v553
  %v555 = vpop.f32.mrb[0].mxu0
  %556 = vmatprep.mubr.f32.mxu0 0.0
  %v557 = vand.u32 %v38, 4294901760
  %558 = vmatmul.mubr.f32.gmra.mrb[0].mxu0 %v557
  %v559 = vpop.f32.mrb[0].mxu0
  %v560 = vadd.f32 %v460, %v559
  %v561 = vpop.f32.mrb[0].mxu0
  %562 = vmatprep.mubr.f32.mxu0 0.0
  %v563 = vand.u32 %v41, 4294901760
  %564 = vmatmul.mubr.f32.gmra.mrb[0].mxu0 %v563
  %v565 = vpop.f32.mrb[0].mxu0
  %v566 = vadd.f32 %v468, %v565
  %v567 = vpop.f32.mrb[0].mxu0
  %568 = vdwg.mxu0
  %569 = vmatprep.subr.mxu0 0.0
  %v570 = vand.u32 %v45, 4294901760
  %571 = vmatpush1.msra.mxu0 %v570
  %572 = vmatprep.subr.mxu0 0.0
  %573 = vmatpush1.msra.mxu0 0.0
  %574 = vmatprep.subr.mxu0 0.0
  %575 = vmatpush1.msra.mxu0 0.0
  %576 = vmatprep.subr.mxu0 0.0
  %577 = vmatpush1.msra.mxu0 0.0
  %578 = vmatprep.subr.mxu0 0.0
  %579 = vmatpush1.msra.mxu0 0.0
  %580 = vmatprep.subr.mxu0 0.0
  %581 = vmatpush1.msra.mxu0 0.0
  %582 = vmatprep.subr.mxu0 0.0
  %583 = vmatpush1.msra.mxu0 0.0
  %584 = vmatprep.subr.mxu0 0.0
  %585 = vmatpush1.msra.mxu0 0.0
  %586 = vmatprep.subr.mxu0 0.0
  %587 = vmatpush1.msra.mxu0 0.0
  %588 = vmatprep.subr.mxu0 0.0
  %589 = vmatpush1.msra.mxu0 0.0
  %590 = vmatprep.subr.mxu0 0.0
  %591 = vmatpush1.msra.mxu0 0.0
  %592 = vmatprep.subr.mxu0 0.0
  %593 = vmatpush1.msra.mxu0 0.0
  %594 = vmatprep.subr.mxu0 0.0
  %595 = vmatpush1.msra.mxu0 0.0
  %596 = vmatprep.subr.mxu0 0.0
  %597 = vmatpush1.msra.mxu0 0.0
  %598 = vmatprep.subr.mxu0 0.0
  %599 = vmatpush1.msra.mxu0 0.0
  %600 = vmatprep.subr.mxu0 0.0
  %601 = vmatpush1.msra.mxu0 0.0
  %602 = vmatprep.subr.mxu0 0.0
  %603 = vmatpush1.msra.mxu0 0.0
  %604 = vmatprep.subr.mxu0 0.0
  %605 = vmatpush1.msra.mxu0 0.0
  %606 = vmatprep.subr.mxu0 0.0
  %607 = vmatpush1.msra.mxu0 0.0
  %608 = vmatprep.subr.mxu0 0.0
  %609 = vmatpush1.msra.mxu0 0.0
  %610 = vmatprep.subr.mxu0 0.0
  %611 = vmatpush1.msra.mxu0 0.0
  %612 = vmatprep.subr.mxu0 0.0
  %613 = vmatpush1.msra.mxu0 0.0
  %614 = vmatprep.subr.mxu0 0.0
  %615 = vmatpush1.msra.mxu0 0.0
  %616 = vmatprep.subr.mxu0 0.0
  %617 = vmatpush1.msra.mxu0 0.0
  %618 = vmatprep.subr.mxu0 0.0
  %619 = vmatpush1.msra.mxu0 0.0
  %620 = vmatprep.subr.mxu0 0.0
  %621 = vmatpush1.msra.mxu0 0.0
  %622 = vmatprep.subr.mxu0 0.0
  %623 = vmatpush1.msra.mxu0 0.0
  %624 = vmatprep.subr.mxu0 0.0
  %625 = vmatpush1.msra.mxu0 0.0
  %626 = vmatprep.subr.mxu0 0.0
  %627 = vmatpush1.msra.mxu0 0.0
  %628 = vmatprep.subr.mxu0 0.0
  %629 = vmatpush1.msra.mxu0 0.0
  %630 = vmatprep.subr.mxu0 0.0
  %631 = vmatpush1.msra.mxu0 0.0
  %632 = vmatprep.subr.mxu0 0.0
  %633 = vmatpush1.msra.mxu0 0.0
  %634 = vmatprep.mubr.f32.mxu0 0.0
  %v635 = vand.u32 %v29, 4294901760
  %636 = vmatmul.mubr.f32.gmra.mrb[0].mxu0 %v635
  %v637 = vpop.f32.mrb[0].mxu0
  %v638 = vadd.f32 %v542, %v637
  %v639 = vpop.f32.mrb[0].mxu0
  %640 = vmatprep.mubr.f32.mxu0 0.0
  %v641 = vand.u32 %v32, 4294901760
  %642 = vmatmul.mubr.f32.gmra.mrb[0].mxu0 %v641
  %v643 = vpop.f32.mrb[0].mxu0
  %v644 = vadd.f32 %v548, %v643
  %v645 = vpop.f32.mrb[0].mxu0
  %646 = vmatprep.mubr.f32.mxu0 0.0
  %v647 = vand.u32 %v35, 4294901760
  %648 = vmatmul.mubr.f32.gmra.mrb[0].mxu0 %v647
  %v649 = vpop.f32.mrb[0].mxu0
  %v650 = vadd.f32 %v554, %v649
  %v651 = vpop.f32.mrb[0].mxu0
  %652 = vmatprep.mubr.f32.mxu0 0.0
  %v653 = vand.u32 %v38, 4294901760
  %654 = vmatmul.mubr.f32.gmra.mrb[0].mxu0 %v653
  %v655 = vpop.f32.mrb[0].mxu0
  %v656 = vadd.f32 %v560, %v655
  %v657 = vpop.f32.mrb[0].mxu0
  %658 = vmatprep.mubr.f32.mxu0 0.0
  %v659 = vand.u32 %v41, 4294901760
  %660 = vmatmul.mubr.f32.gmra.mrb[0].mxu0 %v659
  %v661 = vpop.f32.mrb[0].mxu0
  %v662 = vadd.f32 %v566, %v661
  %v663 = vpop.f32.mrb[0].mxu0
  %664 = vdwg.mxu0
  %v665 = vmax.f32 %v638, 0.0
  %v666 = vmax.f32 %v644, 0.0
  %v667 = vmax.f32 %v650, 0.0
  %v668 = vmax.f32 %v656, 0.0
  %v669 = vmax.f32 %v662, 0.0
  %671 = vset.pattern.permute.xlu0 0
  %672 = vperm.xlu0 %671, %v25
  %v673 = vpop.permute.xlu0 %672
  %v675 = vlaneseq
  %v676 = vshrl.u32 %v675, 7
  %v677 = vsub.s32 0, %v676
  %v678 = vrot.slane %v673, %v677
  %vm679 = vcmask 326656
  %v681 = vsel %vm679, %v24, 0
  %683 = vmatprep.subr.mxu0 0.0
  %v684 = vand.u32 %v665, 4294901760
  %685 = vmatpush1.msra.mxu0 %v684
  %686 = vmatprep.subr.mxu0 0.0
  %v687 = vand.u32 %v666, 4294901760
  %688 = vmatpush1.msra.mxu0 %v687
  %689 = vmatprep.subr.mxu0 0.0
  %v690 = vand.u32 %v667, 4294901760
  %691 = vmatpush1.msra.mxu0 %v690
  %692 = vmatprep.subr.mxu0 0.0
  %v693 = vand.u32 %v668, 4294901760
  %694 = vmatpush1.msra.mxu0 %v693
  %695 = vmatprep.subr.mxu0 0.0
  %v696 = vand.u32 %v669, 4294901760
  %697 = vmatpush1.msra.mxu0 %v696
  %698 = vmatprep.subr.mxu0 0.0
  %699 = vmatpush1.msra.mxu0 0.0
  %700 = vmatprep.subr.mxu0 0.0
  %701 = vmatpush1.msra.mxu0 0.0
  %702 = vmatprep.subr.mxu0 0.0
  %703 = vmatpush1.msra.mxu0 0.0
  %704 = vmatprep.subr.mxu0 0.0
  %705 = vmatpush1.msra.mxu0 0.0
  %706 = vmatprep.subr.mxu0 0.0
  %707 = vmatpush1.msra.mxu0 0.0
  %708 = vmatprep.subr.mxu0 0.0
  %709 = vmatpush1.msra.mxu0 0.0
  %710 = vmatprep.subr.mxu0 0.0
  %711 = vmatpush1.msra.mxu0 0.0
  %712 = vmatprep.subr.mxu0 0.0
  %713 = vmatpush1.msra.mxu0 0.0
  %714 = vmatprep.subr.mxu0 0.0
  %715 = vmatpush1.msra.mxu0 0.0
  %716 = vmatprep.subr.mxu0 0.0
  %717 = vmatpush1.msra.mxu0 0.0
  %718 = vmatprep.subr.mxu0 0.0
  %719 = vmatpush1.msra.mxu0 0.0
  %720 = vmatprep.subr.mxu0 0.0
  %721 = vmatpush1.msra.mxu0 0.0
  %722 = vmatprep.subr.mxu0 0.0
  %723 = vmatpush1.msra.mxu0 0.0
  %724 = vmatprep.subr.mxu0 0.0
  %725 = vmatpush1.msra.mxu0 0.0
  %726 = vmatprep.subr.mxu0 0.0
  %727 = vmatpush1.msra.mxu0 0.0
  %728 = vmatprep.subr.mxu0 0.0
  %729 = vmatpush1.msra.mxu0 0.0
  %730 = vmatprep.subr.mxu0 0.0
  %731 = vmatpush1.msra.mxu0 0.0
  %732 = vmatprep.subr.mxu0 0.0
  %733 = vmatpush1.msra.mxu0 0.0
  %734 = vmatprep.subr.mxu0 0.0
  %735 = vmatpush1.msra.mxu0 0.0
  %736 = vmatprep.subr.mxu0 0.0
  %737 = vmatpush1.msra.mxu0 0.0
  %738 = vmatprep.subr.mxu0 0.0
  %739 = vmatpush1.msra.mxu0 0.0
  %740 = vmatprep.subr.mxu0 0.0
  %741 = vmatpush1.msra.mxu0 0.0
  %742 = vmatprep.subr.mxu0 0.0
  %743 = vmatpush1.msra.mxu0 0.0
  %744 = vmatprep.subr.mxu0 0.0
  %745 = vmatpush1.msra.mxu0 0.0
  %746 = vmatprep.subr.mxu0 0.0
  %747 = vmatpush1.msra.mxu0 0.0
  %748 = vmatprep.subr.mxu0 0.0
  %749 = vmatpush1.msra.mxu0 0.0
  %750 = vmatprep.subr.mxu0 0.0
  %751 = vmatpush1.msra.mxu0 0.0
  %752 = vmatprep.mubr.f32.mxu0 0.0
  %v753 = vand.u32 %v681, 4294901760
  %v754 = vsub.f32 %v681, %v753
  %v755 = vand.u32 %v754, 4294901760
  %v756 = vsub.f32 %v754, %v755
  %v757 = vand.u32 %v756, 4294901760
  %758 = vmatmul.mubr.f32.gmra.mrb[0].mxu0 %v757
  %v759 = vpop.f32.mrb[0].mxu0
  %v760 = vadd.f32 %v678, %v759
  %v761 = vpop.f32.mrb[0].mxu0
  %762 = vdwg.mxu0
  %763 = vmatprep.subr.mxu0 0.0
  %v764 = vand.u32 %v665, 4294901760
  %v765 = vsub.f32 %v665, %v764
  %v766 = vand.u32 %v765, 4294901760
  %v767 = vsub.f32 %v765, %v766
  %v768 = vand.u32 %v767, 4294901760
  %769 = vmatpush1.msra.mxu0 %v768
  %770 = vmatprep.subr.mxu0 0.0
  %v771 = vand.u32 %v666, 4294901760
  %v772 = vsub.f32 %v666, %v771
  %v773 = vand.u32 %v772, 4294901760
  %v774 = vsub.f32 %v772, %v773
  %v775 = vand.u32 %v774, 4294901760
  %776 = vmatpush1.msra.mxu0 %v775
  %777 = vmatprep.subr.mxu0 0.0
  %v778 = vand.u32 %v667, 4294901760
  %v779 = vsub.f32 %v667, %v778
  %v780 = vand.u32 %v779, 4294901760
  %v781 = vsub.f32 %v779, %v780
  %v782 = vand.u32 %v781, 4294901760
  %783 = vmatpush1.msra.mxu0 %v782
  %784 = vmatprep.subr.mxu0 0.0
  %v785 = vand.u32 %v668, 4294901760
  %v786 = vsub.f32 %v668, %v785
  %v787 = vand.u32 %v786, 4294901760
  %v788 = vsub.f32 %v786, %v787
  %v789 = vand.u32 %v788, 4294901760
  %790 = vmatpush1.msra.mxu0 %v789
  %791 = vmatprep.subr.mxu0 0.0
  %v792 = vand.u32 %v669, 4294901760
  %v793 = vsub.f32 %v669, %v792
  %v794 = vand.u32 %v793, 4294901760
  %v795 = vsub.f32 %v793, %v794
  %v796 = vand.u32 %v795, 4294901760
  %797 = vmatpush1.msra.mxu0 %v796
  %798 = vmatprep.subr.mxu0 0.0
  %799 = vmatpush1.msra.mxu0 0.0
  %800 = vmatprep.subr.mxu0 0.0
  %801 = vmatpush1.msra.mxu0 0.0
  %802 = vmatprep.subr.mxu0 0.0
  %803 = vmatpush1.msra.mxu0 0.0
  %804 = vmatprep.subr.mxu0 0.0
  %805 = vmatpush1.msra.mxu0 0.0
  %806 = vmatprep.subr.mxu0 0.0
  %807 = vmatpush1.msra.mxu0 0.0
  %808 = vmatprep.subr.mxu0 0.0
  %809 = vmatpush1.msra.mxu0 0.0
  %810 = vmatprep.subr.mxu0 0.0
  %811 = vmatpush1.msra.mxu0 0.0
  %812 = vmatprep.subr.mxu0 0.0
  %813 = vmatpush1.msra.mxu0 0.0
  %814 = vmatprep.subr.mxu0 0.0
  %815 = vmatpush1.msra.mxu0 0.0
  %816 = vmatprep.subr.mxu0 0.0
  %817 = vmatpush1.msra.mxu0 0.0
  %818 = vmatprep.subr.mxu0 0.0
  %819 = vmatpush1.msra.mxu0 0.0
  %820 = vmatprep.subr.mxu0 0.0
  %821 = vmatpush1.msra.mxu0 0.0
  %822 = vmatprep.subr.mxu0 0.0
  %823 = vmatpush1.msra.mxu0 0.0
  %824 = vmatprep.subr.mxu0 0.0
  %825 = vmatpush1.msra.mxu0 0.0
  %826 = vmatprep.subr.mxu0 0.0
  %827 = vmatpush1.msra.mxu0 0.0
  %828 = vmatprep.subr.mxu0 0.0
  %829 = vmatpush1.msra.mxu0 0.0
  %830 = vmatprep.subr.mxu0 0.0
  %831 = vmatpush1.msra.mxu0 0.0
  %832 = vmatprep.subr.mxu0 0.0
  %833 = vmatpush1.msra.mxu0 0.0
  %834 = vmatprep.subr.mxu0 0.0
  %835 = vmatpush1.msra.mxu0 0.0
  %836 = vmatprep.subr.mxu0 0.0
  %837 = vmatpush1.msra.mxu0 0.0
  %838 = vmatprep.subr.mxu0 0.0
  %839 = vmatpush1.msra.mxu0 0.0
  %840 = vmatprep.subr.mxu0 0.0
  %841 = vmatpush1.msra.mxu0 0.0
  %842 = vmatprep.subr.mxu0 0.0
  %843 = vmatpush1.msra.mxu0 0.0
  %844 = vmatprep.subr.mxu0 0.0
  %845 = vmatpush1.msra.mxu0 0.0
  %846 = vmatprep.subr.mxu0 0.0
  %847 = vmatpush1.msra.mxu0 0.0
  %848 = vmatprep.subr.mxu0 0.0
  %849 = vmatpush1.msra.mxu0 0.0
  %850 = vmatprep.subr.mxu0 0.0
  %851 = vmatpush1.msra.mxu0 0.0
  %852 = vmatprep.mubr.f32.mxu0 0.0
  %v853 = vand.u32 %v681, 4294901760
  %854 = vmatmul.mubr.f32.gmra.mrb[0].mxu0 %v853
  %v855 = vpop.f32.mrb[0].mxu0
  %v856 = vadd.f32 %v760, %v855
  %v857 = vpop.f32.mrb[0].mxu0
  %858 = vdwg.mxu0
  %859 = vmatprep.subr.mxu0 0.0
  %v860 = vand.u32 %v665, 4294901760
  %v861 = vsub.f32 %v665, %v860
  %862 = vmatpush1.msra.mxu0 %v861
  %863 = vmatprep.subr.mxu0 0.0
  %v864 = vand.u32 %v666, 4294901760
  %v865 = vsub.f32 %v666, %v864
  %866 = vmatpush1.msra.mxu0 %v865
  %867 = vmatprep.subr.mxu0 0.0
  %v868 = vand.u32 %v667, 4294901760
  %v869 = vsub.f32 %v667, %v868
  %870 = vmatpush1.msra.mxu0 %v869
  %871 = vmatprep.subr.mxu0 0.0
  %v872 = vand.u32 %v668, 4294901760
  %v873 = vsub.f32 %v668, %v872
  %874 = vmatpush1.msra.mxu0 %v873
  %875 = vmatprep.subr.mxu0 0.0
  %v876 = vand.u32 %v669, 4294901760
  %v877 = vsub.f32 %v669, %v876
  %878 = vmatpush1.msra.mxu0 %v877
  %879 = vmatprep.subr.mxu0 0.0
  %880 = vmatpush1.msra.mxu0 0.0
  %881 = vmatprep.subr.mxu0 0.0
  %882 = vmatpush1.msra.mxu0 0.0
  %883 = vmatprep.subr.mxu0 0.0
  %884 = vmatpush1.msra.mxu0 0.0
  %885 = vmatprep.subr.mxu0 0.0
  %886 = vmatpush1.msra.mxu0 0.0
  %887 = vmatprep.subr.mxu0 0.0
  %888 = vmatpush1.msra.mxu0 0.0
  %889 = vmatprep.subr.mxu0 0.0
  %890 = vmatpush1.msra.mxu0 0.0
  %891 = vmatprep.subr.mxu0 0.0
  %892 = vmatpush1.msra.mxu0 0.0
  %893 = vmatprep.subr.mxu0 0.0
  %894 = vmatpush1.msra.mxu0 0.0
  %895 = vmatprep.subr.mxu0 0.0
  %896 = vmatpush1.msra.mxu0 0.0
  %897 = vmatprep.subr.mxu0 0.0
  %898 = vmatpush1.msra.mxu0 0.0
  %899 = vmatprep.subr.mxu0 0.0
  %900 = vmatpush1.msra.mxu0 0.0
  %901 = vmatprep.subr.mxu0 0.0
  %902 = vmatpush1.msra.mxu0 0.0
  %903 = vmatprep.subr.mxu0 0.0
  %904 = vmatpush1.msra.mxu0 0.0
  %905 = vmatprep.subr.mxu0 0.0
  %906 = vmatpush1.msra.mxu0 0.0
  %907 = vmatprep.subr.mxu0 0.0
  %908 = vmatpush1.msra.mxu0 0.0
  %909 = vmatprep.subr.mxu0 0.0
  %910 = vmatpush1.msra.mxu0 0.0
  %911 = vmatprep.subr.mxu0 0.0
  %912 = vmatpush1.msra.mxu0 0.0
  %913 = vmatprep.subr.mxu0 0.0
  %914 = vmatpush1.msra.mxu0 0.0
  %915 = vmatprep.subr.mxu0 0.0
  %916 = vmatpush1.msra.mxu0 0.0
  %917 = vmatprep.subr.mxu0 0.0
  %918 = vmatpush1.msra.mxu0 0.0
  %919 = vmatprep.subr.mxu0 0.0
  %920 = vmatpush1.msra.mxu0 0.0
  %921 = vmatprep.subr.mxu0 0.0
  %922 = vmatpush1.msra.mxu0 0.0
  %923 = vmatprep.subr.mxu0 0.0
  %924 = vmatpush1.msra.mxu0 0.0
  %925 = vmatprep.subr.mxu0 0.0
  %926 = vmatpush1.msra.mxu0 0.0
  %927 = vmatprep.subr.mxu0 0.0
  %928 = vmatpush1.msra.mxu0 0.0
  %929 = vmatprep.subr.mxu0 0.0
  %930 = vmatpush1.msra.mxu0 0.0
  %931 = vmatprep.subr.mxu0 0.0
  %932 = vmatpush1.msra.mxu0 0.0
  %933 = vmatprep.mubr.f32.mxu0 0.0
  %v934 = vand.u32 %v681, 4294901760
  %v935 = vsub.f32 %v681, %v934
  %936 = vmatmul.mubr.f32.gmra.mrb[0].mxu0 %v935
  %v937 = vpop.f32.mrb[0].mxu0
  %v938 = vadd.f32 %v856, %v937
  %v939 = vpop.f32.mrb[0].mxu0
  %940 = vdwg.mxu0
  %941 = vmatprep.subr.mxu0 0.0
  %v942 = vand.u32 %v665, 4294901760
  %943 = vmatpush1.msra.mxu0 %v942
  %944 = vmatprep.subr.mxu0 0.0
  %v945 = vand.u32 %v666, 4294901760
  %946 = vmatpush1.msra.mxu0 %v945
  %947 = vmatprep.subr.mxu0 0.0
  %v948 = vand.u32 %v667, 4294901760
  %949 = vmatpush1.msra.mxu0 %v948
  %950 = vmatprep.subr.mxu0 0.0
  %v951 = vand.u32 %v668, 4294901760
  %952 = vmatpush1.msra.mxu0 %v951
  %953 = vmatprep.subr.mxu0 0.0
  %v954 = vand.u32 %v669, 4294901760
  %955 = vmatpush1.msra.mxu0 %v954
  %956 = vmatprep.subr.mxu0 0.0
  %957 = vmatpush1.msra.mxu0 0.0
  %958 = vmatprep.subr.mxu0 0.0
  %959 = vmatpush1.msra.mxu0 0.0
  %960 = vmatprep.subr.mxu0 0.0
  %961 = vmatpush1.msra.mxu0 0.0
  %962 = vmatprep.subr.mxu0 0.0
  %963 = vmatpush1.msra.mxu0 0.0
  %964 = vmatprep.subr.mxu0 0.0
  %965 = vmatpush1.msra.mxu0 0.0
  %966 = vmatprep.subr.mxu0 0.0
  %967 = vmatpush1.msra.mxu0 0.0
  %968 = vmatprep.subr.mxu0 0.0
  %969 = vmatpush1.msra.mxu0 0.0
  %970 = vmatprep.subr.mxu0 0.0
  %971 = vmatpush1.msra.mxu0 0.0
  %972 = vmatprep.subr.mxu0 0.0
  %973 = vmatpush1.msra.mxu0 0.0
  %974 = vmatprep.subr.mxu0 0.0
  %975 = vmatpush1.msra.mxu0 0.0
  %976 = vmatprep.subr.mxu0 0.0
  %977 = vmatpush1.msra.mxu0 0.0
  %978 = vmatprep.subr.mxu0 0.0
  %979 = vmatpush1.msra.mxu0 0.0
  %980 = vmatprep.subr.mxu0 0.0
  %981 = vmatpush1.msra.mxu0 0.0
  %982 = vmatprep.subr.mxu0 0.0
  %983 = vmatpush1.msra.mxu0 0.0
  %984 = vmatprep.subr.mxu0 0.0
  %985 = vmatpush1.msra.mxu0 0.0
  %986 = vmatprep.subr.mxu0 0.0
  %987 = vmatpush1.msra.mxu0 0.0
  %988 = vmatprep.subr.mxu0 0.0
  %989 = vmatpush1.msra.mxu0 0.0
  %990 = vmatprep.subr.mxu0 0.0
  %991 = vmatpush1.msra.mxu0 0.0
  %992 = vmatprep.subr.mxu0 0.0
  %993 = vmatpush1.msra.mxu0 0.0
  %994 = vmatprep.subr.mxu0 0.0
  %995 = vmatpush1.msra.mxu0 0.0
  %996 = vmatprep.subr.mxu0 0.0
  %997 = vmatpush1.msra.mxu0 0.0
  %998 = vmatprep.subr.mxu0 0.0
  %999 = vmatpush1.msra.mxu0 0.0
  %1000 = vmatprep.subr.mxu0 0.0
  %1001 = vmatpush1.msra.mxu0 0.0
  %1002 = vmatprep.subr.mxu0 0.0
  %1003 = vmatpush1.msra.mxu0 0.0
  %1004 = vmatprep.subr.mxu0 0.0
  %1005 = vmatpush1.msra.mxu0 0.0
  %1006 = vmatprep.subr.mxu0 0.0
  %1007 = vmatpush1.msra.mxu0 0.0
  %1008 = vmatprep.subr.mxu0 0.0
  %1009 = vmatpush1.msra.mxu0 0.0
  %1010 = vmatprep.mubr.f32.mxu0 0.0
  %v1011 = vand.u32 %v681, 4294901760
  %v1012 = vsub.f32 %v681, %v1011
  %v1013 = vand.u32 %v1012, 4294901760
  %1014 = vmatmul.mubr.f32.gmra.mrb[0].mxu0 %v1013
  %v1015 = vpop.f32.mrb[0].mxu0
  %v1016 = vadd.f32 %v938, %v1015
  %v1017 = vpop.f32.mrb[0].mxu0
  %1018 = vdwg.mxu0
  %1019 = vmatprep.subr.mxu0 0.0
  %v1020 = vand.u32 %v665, 4294901760
  %v1021 = vsub.f32 %v665, %v1020
  %v1022 = vand.u32 %v1021, 4294901760
  %1023 = vmatpush1.msra.mxu0 %v1022
  %1024 = vmatprep.subr.mxu0 0.0
  %v1025 = vand.u32 %v666, 4294901760
  %v1026 = vsub.f32 %v666, %v1025
  %v1027 = vand.u32 %v1026, 4294901760
  %1028 = vmatpush1.msra.mxu0 %v1027
  %1029 = vmatprep.subr.mxu0 0.0
  %v1030 = vand.u32 %v667, 4294901760
  %v1031 = vsub.f32 %v667, %v1030
  %v1032 = vand.u32 %v1031, 4294901760
  %1033 = vmatpush1.msra.mxu0 %v1032
  %1034 = vmatprep.subr.mxu0 0.0
  %v1035 = vand.u32 %v668, 4294901760
  %v1036 = vsub.f32 %v668, %v1035
  %v1037 = vand.u32 %v1036, 4294901760
  %1038 = vmatpush1.msra.mxu0 %v1037
  %1039 = vmatprep.subr.mxu0 0.0
  %v1040 = vand.u32 %v669, 4294901760
  %v1041 = vsub.f32 %v669, %v1040
  %v1042 = vand.u32 %v1041, 4294901760
  %1043 = vmatpush1.msra.mxu0 %v1042
  %1044 = vmatprep.subr.mxu0 0.0
  %1045 = vmatpush1.msra.mxu0 0.0
  %1046 = vmatprep.subr.mxu0 0.0
  %1047 = vmatpush1.msra.mxu0 0.0
  %1048 = vmatprep.subr.mxu0 0.0
  %1049 = vmatpush1.msra.mxu0 0.0
  %1050 = vmatprep.subr.mxu0 0.0
  %1051 = vmatpush1.msra.mxu0 0.0
  %1052 = vmatprep.subr.mxu0 0.0
  %1053 = vmatpush1.msra.mxu0 0.0
  %1054 = vmatprep.subr.mxu0 0.0
  %1055 = vmatpush1.msra.mxu0 0.0
  %1056 = vmatprep.subr.mxu0 0.0
  %1057 = vmatpush1.msra.mxu0 0.0
  %1058 = vmatprep.subr.mxu0 0.0
  %1059 = vmatpush1.msra.mxu0 0.0
  %1060 = vmatprep.subr.mxu0 0.0
  %1061 = vmatpush1.msra.mxu0 0.0
  %1062 = vmatprep.subr.mxu0 0.0
  %1063 = vmatpush1.msra.mxu0 0.0
  %1064 = vmatprep.subr.mxu0 0.0
  %1065 = vmatpush1.msra.mxu0 0.0
  %1066 = vmatprep.subr.mxu0 0.0
  %1067 = vmatpush1.msra.mxu0 0.0
  %1068 = vmatprep.subr.mxu0 0.0
  %1069 = vmatpush1.msra.mxu0 0.0
  %1070 = vmatprep.subr.mxu0 0.0
  %1071 = vmatpush1.msra.mxu0 0.0
  %1072 = vmatprep.subr.mxu0 0.0
  %1073 = vmatpush1.msra.mxu0 0.0
  %1074 = vmatprep.subr.mxu0 0.0
  %1075 = vmatpush1.msra.mxu0 0.0
  %1076 = vmatprep.subr.mxu0 0.0
  %1077 = vmatpush1.msra.mxu0 0.0
  %1078 = vmatprep.subr.mxu0 0.0
  %1079 = vmatpush1.msra.mxu0 0.0
  %1080 = vmatprep.subr.mxu0 0.0
  %1081 = vmatpush1.msra.mxu0 0.0
  %1082 = vmatprep.subr.mxu0 0.0
  %1083 = vmatpush1.msra.mxu0 0.0
  %1084 = vmatprep.subr.mxu0 0.0
  %1085 = vmatpush1.msra.mxu0 0.0
  %1086 = vmatprep.subr.mxu0 0.0
  %1087 = vmatpush1.msra.mxu0 0.0
  %1088 = vmatprep.subr.mxu0 0.0
  %1089 = vmatpush1.msra.mxu0 0.0
  %1090 = vmatprep.subr.mxu0 0.0
  %1091 = vmatpush1.msra.mxu0 0.0
  %1092 = vmatprep.subr.mxu0 0.0
  %1093 = vmatpush1.msra.mxu0 0.0
  %1094 = vmatprep.subr.mxu0 0.0
  %1095 = vmatpush1.msra.mxu0 0.0
  %1096 = vmatprep.subr.mxu0 0.0
  %1097 = vmatpush1.msra.mxu0 0.0
  %1098 = vmatprep.mubr.f32.mxu0 0.0
  %v1099 = vand.u32 %v681, 4294901760
  %1100 = vmatmul.mubr.f32.gmra.mrb[0].mxu0 %v1099
  %v1101 = vpop.f32.mrb[0].mxu0
  %v1102 = vadd.f32 %v1016, %v1101
  %v1103 = vpop.f32.mrb[0].mxu0
  %1104 = vdwg.mxu0
  %1105 = vmatprep.subr.mxu0 0.0
  %v1106 = vand.u32 %v665, 4294901760
  %1107 = vmatpush1.msra.mxu0 %v1106
  %1108 = vmatprep.subr.mxu0 0.0
  %v1109 = vand.u32 %v666, 4294901760
  %1110 = vmatpush1.msra.mxu0 %v1109
  %1111 = vmatprep.subr.mxu0 0.0
  %v1112 = vand.u32 %v667, 4294901760
  %1113 = vmatpush1.msra.mxu0 %v1112
  %1114 = vmatprep.subr.mxu0 0.0
  %v1115 = vand.u32 %v668, 4294901760
  %1116 = vmatpush1.msra.mxu0 %v1115
  %1117 = vmatprep.subr.mxu0 0.0
  %v1118 = vand.u32 %v669, 4294901760
  %1119 = vmatpush1.msra.mxu0 %v1118
  %1120 = vmatprep.subr.mxu0 0.0
  %1121 = vmatpush1.msra.mxu0 0.0
  %1122 = vmatprep.subr.mxu0 0.0
  %1123 = vmatpush1.msra.mxu0 0.0
  %1124 = vmatprep.subr.mxu0 0.0
  %1125 = vmatpush1.msra.mxu0 0.0
  %1126 = vmatprep.subr.mxu0 0.0
  %1127 = vmatpush1.msra.mxu0 0.0
  %1128 = vmatprep.subr.mxu0 0.0
  %1129 = vmatpush1.msra.mxu0 0.0
  %1130 = vmatprep.subr.mxu0 0.0
  %1131 = vmatpush1.msra.mxu0 0.0
  %1132 = vmatprep.subr.mxu0 0.0
  %1133 = vmatpush1.msra.mxu0 0.0
  %1134 = vmatprep.subr.mxu0 0.0
  %1135 = vmatpush1.msra.mxu0 0.0
  %1136 = vmatprep.subr.mxu0 0.0
  %1137 = vmatpush1.msra.mxu0 0.0
  %1138 = vmatprep.subr.mxu0 0.0
  %1139 = vmatpush1.msra.mxu0 0.0
  %1140 = vmatprep.subr.mxu0 0.0
  %1141 = vmatpush1.msra.mxu0 0.0
  %1142 = vmatprep.subr.mxu0 0.0
  %1143 = vmatpush1.msra.mxu0 0.0
  %1144 = vmatprep.subr.mxu0 0.0
  %1145 = vmatpush1.msra.mxu0 0.0
  %1146 = vmatprep.subr.mxu0 0.0
  %1147 = vmatpush1.msra.mxu0 0.0
  %1148 = vmatprep.subr.mxu0 0.0
  %1149 = vmatpush1.msra.mxu0 0.0
  %1150 = vmatprep.subr.mxu0 0.0
  %1151 = vmatpush1.msra.mxu0 0.0
  %1152 = vmatprep.subr.mxu0 0.0
  %1153 = vmatpush1.msra.mxu0 0.0
  %1154 = vmatprep.subr.mxu0 0.0
  %1155 = vmatpush1.msra.mxu0 0.0
  %1156 = vmatprep.subr.mxu0 0.0
  %1157 = vmatpush1.msra.mxu0 0.0
  %1158 = vmatprep.subr.mxu0 0.0
  %1159 = vmatpush1.msra.mxu0 0.0
  %1160 = vmatprep.subr.mxu0 0.0
  %1161 = vmatpush1.msra.mxu0 0.0
  %1162 = vmatprep.subr.mxu0 0.0
  %1163 = vmatpush1.msra.mxu0 0.0
  %1164 = vmatprep.subr.mxu0 0.0
  %1165 = vmatpush1.msra.mxu0 0.0
  %1166 = vmatprep.subr.mxu0 0.0
  %1167 = vmatpush1.msra.mxu0 0.0
  %1168 = vmatprep.subr.mxu0 0.0
  %1169 = vmatpush1.msra.mxu0 0.0
  %1170 = vmatprep.subr.mxu0 0.0
  %1171 = vmatpush1.msra.mxu0 0.0
  %1172 = vmatprep.subr.mxu0 0.0
  %1173 = vmatpush1.msra.mxu0 0.0
  %1174 = vmatprep.mubr.f32.mxu0 0.0
  %v1175 = vand.u32 %v681, 4294901760
  %1176 = vmatmul.mubr.f32.gmra.mrb[0].mxu0 %v1175
  %v1177 = vpop.f32.mrb[0].mxu0
  %v1178 = vadd.f32 %v1102, %v1177
  %v1179 = vpop.f32.mrb[0].mxu0
  %1180 = vdwg.mxu0
  %v1181 = vmax.f32 %v1178, -2.0
  %v1182 = vmin.f32 %v1181, 2.0
  %1183 = vst [vmem:[%s4] sm:$0x1] %v1182
  // Predicated region
  $region18: #{nn_forward.1} parent=0 // pred_check
    _
  $region19: #{nn_forward.1} parent=0 // pred_check_branch
    %1185 = sbr.rel (0) target = $region21
  $region20: #{nn_forward.1} parent=0 // pred_region
    _
  $region21: #{nn_forward.1} parent=0 // pred_fallthru
    _
  // Predicated region
  $region22: #{nn_forward.1} parent=0 // pred_check
    _
  $region23: #{nn_forward.1} parent=0 // pred_check_branch
    %1187 = sbr.rel (0) target = $region25
  $region24: #{nn_forward.1} parent=0 // pred_region
    _
  $region25: #{nn_forward.1} parent=0 // pred_fallthru
    _

</llo_original>
